<compile_context>
chip_gen: v7x
topology: tpu7x:2x2x1
jax: 0.10.0
libtpu: 0.0.40
codegen_flags: <defaults>
</compile_context>

<pallas_src>
import jax
import jax.numpy as jnp
from jax.experimental import pallas as pl
from jax.experimental.pallas import tpu as pltpu


_LANES = 128
_SUBS = 8
_TM_MAX = 8192        # ~28 MiB of double-buffered lane-padded f32 VMEM tiles
_TM_MIN_SPLIT = 1024  # below this, one block; splitting only adds step overhead


def _input_kernel(s_ref, a_ref, ws_ref, wa_ref, b_ref, o_ref):
    # s_ref: (TM, Ks)  a_ref: (TM, Ka)
    # ws_ref: (Ks, N)  wa_ref: (Ka, N)  b_ref: (1, N)  o_ref: (TM, N)
    acc = jnp.dot(s_ref[...], ws_ref[...],
                  preferred_element_type=jnp.float32,
                  precision=jax.lax.Precision.HIGHEST)
    acc = acc + jnp.dot(a_ref[...], wa_ref[...],
                        preferred_element_type=jnp.float32,
                        precision=jax.lax.Precision.HIGHEST)
    o_ref[...] = (acc + b_ref[...]).astype(o_ref.dtype)


def _pick_tile_m(M):
    """Row-tile size. Large tiles + cdiv grid; >=2 grid steps once M >= 1024."""
    if M < _TM_MIN_SPLIT:
        return M                       # whole problem in one block (full-dim block is legal)
    tm = min(_TM_MAX, -(-M // 2))      # at least two steps -> v7x megacore sharding
    return -(-tm // _SUBS) * _SUBS     # sublane-align; ragged tail is masked by Pallas


def _padded_vmem_bytes(rows, cols, itemsize):
    """Bytes one (rows, cols) buffer actually occupies in VMEM after (8,128) padding."""
    return (-(-rows // _SUBS) * _SUBS) * (-(-cols // _LANES) * _LANES) * itemsize


def input_linear_pallas(state2d, action2d, w_state, w_action, bias2d):
    """state2d: (M, Ks), action2d: (M, Ka), w_state: (Ks, N), w_action: (Ka, N), bias2d: (1, N)."""
    M, Ks = state2d.shape
    Ka = action2d.shape[1]
    N = w_state.shape[1]
    K = Ks + Ka

    TM = _pick_tile_m(M)
    grid = (pl.cdiv(M, TM),)

    itemsize = jnp.dtype(state2d.dtype).itemsize
    # (8,128)-padding-aware VMEM accounting: streamed tiles are double-buffered,
    # tiny weights/bias counted double-buffered too; + headroom for Mosaic scratch.
    stream = (_padded_vmem_bytes(TM, Ks, itemsize)
              + _padded_vmem_bytes(TM, Ka, itemsize)
              + _padded_vmem_bytes(TM, N, itemsize))
    resident = (_padded_vmem_bytes(Ks, N, itemsize)
                + _padded_vmem_bytes(Ka, N, itemsize)
                + _padded_vmem_bytes(1, N, itemsize))
    vmem_limit = int(min(max(2 * stream + 2 * resident + (4 << 20), 16 << 20),
                         48 << 20))   # stay well under v7x's 64 MiB physical VMEM

    cost = pl.CostEstimate(
        flops=2 * M * K * N,
        transcendentals=0,
        bytes_accessed=itemsize * (M * K + K * N + N + M * N),
    )

    grid_spec = pl.GridSpec(
        grid=grid,
        in_specs=[
            pl.BlockSpec((TM, Ks), lambda i: (i, 0)),   # state tile (streamed)
            pl.BlockSpec((TM, Ka), lambda i: (i, 0)),   # action tile (streamed)
            pl.BlockSpec((Ks, N), lambda i: (0, 0)),    # W_state (tiny, resident)
            pl.BlockSpec((Ka, N), lambda i: (0, 0)),    # W_action (tiny, resident)
            pl.BlockSpec((1, N), lambda i: (0, 0)),     # bias
        ],
        out_specs=pl.BlockSpec((TM, N), lambda i: (i, 0)),
    )

    return pl.pallas_call(
        _input_kernel,
        out_shape=jax.ShapeDtypeStruct((M, N), state2d.dtype),
        grid_spec=grid_spec,
        cost_estimate=cost,
        compiler_params=pltpu.CompilerParams(
            dimension_semantics=("parallel",),   # independent M tiles -> megacore on v7x
            vmem_limit_bytes=vmem_limit,
        ),
    )(state2d, action2d, w_state, w_action, bias2d)


class InputPallas:
    """JAX/Pallas port of the PyTorch `Input` module."""

    def __init__(self, state_length, action_length, out_length, key):
        in_features = state_length + action_length
        k_w, k_b = jax.random.split(key)
        # nn.Linear default init: U(-1/sqrt(in), 1/sqrt(in))
        bound = 1.0 / jnp.sqrt(jnp.float32(in_features))
        self.weight = jax.random.uniform(
            k_w, (out_length, in_features), jnp.float32, -bound, bound)
        self.bias = jax.random.uniform(
            k_b, (out_length,), jnp.float32, -bound, bound)

        # Pre-transpose once and split along the concat axis so the concat
        # fuses into the kernel as two matmuls (no per-call transpose/concat).
        w_t = self.weight.T                                # (in_features, out)
        self.w_state = jnp.asarray(w_t[:state_length])     # (state_len, out)
        self.w_action = jnp.asarray(w_t[state_length:])    # (action_len, out)
        self.bias2d = self.bias.reshape(1, out_length)     # (1, out)

        self.state_length = state_length
        self.action_length = action_length
        self.out_length = out_length

    def __call__(self, state, action):
        # state: (B, S, state_len), action: (B, S, action_len)
        B, S, _ = state.shape
        s2d = state.reshape(B * S, self.state_length)    # free reshape (view)
        a2d = action.reshape(B * S, self.action_length)  # free reshape (view)
        y2d = input_linear_pallas(s2d, a2d, self.w_state, self.w_action, self.bias2d)
        return y2d.reshape(B, S, self.out_length)


def _reference(module, state, action):
    # Pure-JAX reference: concat + Linear, exactly the PyTorch semantics.
    x = jnp.concatenate([state, action], axis=2)
    return jnp.matmul(x, module.weight.T,
                      precision=jax.lax.Precision.HIGHEST) + module.bias


if __name__ == "__main__":
    key = jax.random.PRNGKey(0)
    k_mod, k_s, k_a = jax.random.split(key, 3)

    batch, seq = 2, 8
    state_len, action_len, out_len = 12, 4, 32

    module = InputPallas(state_len, action_len, out_len, k_mod)

    state = jax.random.normal(k_s, (batch, seq, state_len), jnp.float32)
    action = jax.random.normal(k_a, (batch, seq, action_len), jnp.float32)

    out = module(state, action)
    jax.block_until_ready(out)
    ref = _reference(module, state, action)
    assert out.shape == (batch, seq, out_len)
    assert jnp.allclose(out, ref, atol=1e-5, rtol=1e-5)

    # Also exercise the cdiv grid with a ragged last block and >=2 parallel
    # steps (M = 2*1025 = 2050 rows -> TM=1032, grid=(2,), masked tail).
    st2 = jax.random.normal(jax.random.PRNGKey(1), (2, 1025, state_len), jnp.float32)
    ac2 = jax.random.normal(jax.random.PRNGKey(2), (2, 1025, action_len), jnp.float32)
    out2 = module(st2, ac2)
    jax.block_until_ready(out2)
    ref2 = _reference(module, st2, ac2)
    assert out2.shape == (2, 1025, out_len)
    assert jnp.allclose(out2, ref2, atol=1e-5, rtol=1e-5)

    print("KERNEL_OK")
</pallas_src>

<mosaic_0001>
module attributes {stable_mosaic.version = 11 : i64} {
  func.func @_input_kernel(%arg0: i32, %arg1: memref<16x12xf32, #tpu.memory_space<vmem>>, %arg2: memref<16x4xf32, #tpu.memory_space<vmem>>, %arg3: memref<12x32xf32, #tpu.memory_space<vmem>>, %arg4: memref<4x32xf32, #tpu.memory_space<vmem>>, %arg5: memref<1x32xf32, #tpu.memory_space<vmem>>, %arg6: memref<16x32xf32, #tpu.memory_space<vmem>>) attributes {dimension_semantics = [#tpu.dimension_semantics<parallel>], iteration_bounds = array<i64: 1>, scalar_prefetch = 0 : i64, scratch_operands = 0 : i64, tpu.core_type = #tpu.core_type<tc>, window_params = [{transform_indices = @transform_0, window_bounds = array<i64: 16, 12>}, {transform_indices = @transform_1, window_bounds = array<i64: 16, 4>}, {pipeline_mode = #tpu.pipeline_mode<synchronous>, transform_indices = @transform_2, window_bounds = array<i64: 12, 32>}, {pipeline_mode = #tpu.pipeline_mode<synchronous>, transform_indices = @transform_3, window_bounds = array<i64: 4, 32>}, {pipeline_mode = #tpu.pipeline_mode<synchronous>, transform_indices = @transform_4, window_bounds = array<i64: 1, 32>}, {transform_indices = @transform_5, window_bounds = array<i64: 16, 32>}]} {
    %c0 = arith.constant 0 : index
    %c0_0 = arith.constant 0 : index
    %0 = vector.load %arg1[%c0, %c0_0] : memref<16x12xf32, #tpu.memory_space<vmem>>, vector<16x12xf32>
    %c0_1 = arith.constant 0 : index
    %c0_2 = arith.constant 0 : index
    %1 = vector.load %arg3[%c0_1, %c0_2] : memref<12x32xf32, #tpu.memory_space<vmem>>, vector<12x32xf32>
    %cst = arith.constant dense<0.000000e+00> : vector<16x32xf32>
    %2 = tpu.matmul %0, %1, %cst {dimension_numbers = #tpu.dot_dimension_numbers<[1], [0], [0], [1], [0, 0, 1, 1], [], []>, precision = #tpu.contract_precision<fp32>} : vector<16x12xf32>, vector<12x32xf32>, vector<16x32xf32> -> vector<16x32xf32>
    %c0_3 = arith.constant 0 : index
    %c0_4 = arith.constant 0 : index
    %3 = vector.load %arg2[%c0_3, %c0_4] : memref<16x4xf32, #tpu.memory_space<vmem>>, vector<16x4xf32>
    %c0_5 = arith.constant 0 : index
    %c0_6 = arith.constant 0 : index
    %4 = vector.load %arg4[%c0_5, %c0_6] : memref<4x32xf32, #tpu.memory_space<vmem>>, vector<4x32xf32>
    %cst_7 = arith.constant dense<0.000000e+00> : vector<16x32xf32>
    %5 = tpu.matmul %3, %4, %cst_7 {dimension_numbers = #tpu.dot_dimension_numbers<[1], [0], [0], [1], [0, 0, 1, 1], [], []>, precision = #tpu.contract_precision<fp32>} : vector<16x4xf32>, vector<4x32xf32>, vector<16x32xf32> -> vector<16x32xf32>
    %6 = arith.addf %2, %5 : vector<16x32xf32>
    %c0_8 = arith.constant 0 : index
    %c0_9 = arith.constant 0 : index
    %7 = vector.load %arg5[%c0_8, %c0_9] : memref<1x32xf32, #tpu.memory_space<vmem>>, vector<1x32xf32>
    %8 = vector.broadcast %7 : vector<1x32xf32> to vector<16x32xf32>
    %9 = arith.addf %6, %8 : vector<16x32xf32>
    %c0_10 = arith.constant 0 : index
    %c0_11 = arith.constant 0 : index
    %10 = vector.load %arg6[%c0_10, %c0_11] : memref<16x32xf32, #tpu.memory_space<vmem>>, vector<16x32xf32>
    tpu.vector_store %arg6[%c0_10, %c0_11], %9 {strides = array<i32>} : memref<16x32xf32, #tpu.memory_space<vmem>>, vector<16x32xf32>,
    return
  }
  func.func @transform_0(%arg0: i32) -> (i32, i32) {
    %c0_i32 = arith.constant 0 : i32
    %c0_i32_0 = arith.constant 0 : i32
    return %arg0, %c0_i32 : i32, i32
  }
  func.func @transform_1(%arg0: i32) -> (i32, i32) {
    %c0_i32 = arith.constant 0 : i32
    %c0_i32_0 = arith.constant 0 : i32
    return %arg0, %c0_i32 : i32, i32
  }
  func.func @transform_2(%arg0: i32) -> (i32, i32) {
    %c0_i32 = arith.constant 0 : i32
    %c0_i32_0 = arith.constant 0 : i32
    %c0_i32_1 = arith.constant 0 : i32
    return %c0_i32, %c0_i32_0 : i32, i32
  }
  func.func @transform_3(%arg0: i32) -> (i32, i32) {
    %c0_i32 = arith.constant 0 : i32
    %c0_i32_0 = arith.constant 0 : i32
    %c0_i32_1 = arith.constant 0 : i32
    return %c0_i32, %c0_i32_0 : i32, i32
  }
  func.func @transform_4(%arg0: i32) -> (i32, i32) {
    %c0_i32 = arith.constant 0 : i32
    %c0_i32_0 = arith.constant 0 : i32
    %c0_i32_1 = arith.constant 0 : i32
    return %c0_i32, %c0_i32_0 : i32, i32
  }
  func.func @transform_5(%arg0: i32) -> (i32, i32) {
    %c0_i32 = arith.constant 0 : i32
    %c0_i32_0 = arith.constant 0 : i32
    return %arg0, %c0_i32 : i32, i32
  }
}

</mosaic_0001>

<llo_original>
// kernel: tpu_custom_call.1
$region0: #{tpu_custom_call.1}
  #allocation0 [shape = 'u32[]', space=smem, size = 0x4, offset = 0x4, fixed_abs, tag = 'smem constant byte address 0x4 - core index']
  #allocation1 [shape = 'u32[144,128]{1,0:T(1,128)}', space=vmem, size = 0x12000, scoped, tag = 'internal scratch']
  %s0 = inlined_call_operand.vmem [shape: f32[16,12], index: 0, kind: input, shape index: {}]
  %s1 = inlined_call_operand.vmem [shape: f32[16,4], index: 1, kind: input, shape index: {}]
  %s2 = inlined_call_operand.hbm [shape: f32[12,32], index: 2, kind: input, shape index: {}]
  %s3 = inlined_call_operand.vmem [shape: f32[4,32], index: 3, kind: input, shape index: {}]
  %s4 = inlined_call_operand.vmem [shape: f32[1,32], index: 4, kind: input, shape index: {}]
  %s5 = inlined_call_operand.hbm [shape: f32[16,32], index: 5, kind: output, shape index: {}]
  %s6 = sld [smem:[#allocation0]]
  $region34: #{tpu_custom_call.1} parent=0
    _
  %s8 = ssub.s32 1, %s6
  %s9 = scalar_select 0, %s8, %s6
  $region1: #{tpu_custom_call.1} parent=0
    #allocation2 [shape = 'u8[8192]{0}', space=vmem, size = 0x2000, scoped, tag = 'input window, operand 2, single buffered']
    #allocation3 [shape = 's32[1]{0}', space=sflag, size = 0x4, scoped, tag = 'scoped memory for tpu_custom_call.1']
    #allocation4 [shape = 's32[1]{0}', space=sflag, size = 0x4, scoped, tag = 'scoped memory for tpu_custom_call.1']
    #allocation5 [shape = 'u8[8192]{0}', space=vmem, size = 0x2000, scoped, tag = 'output window, operand 0, single buffered']
    %10 = vsyncpa [#allocation3], 0
    %11 = vsyncpa [#allocation4], 0
    // Predicated region
    $region2: #{tpu_custom_call.1} parent=1 // pred_check
      _
    $region3: #{tpu_custom_call.1} parent=1 // pred_check_branch
      %13 = sbr.rel (0) target = $region5
    $region4: #{tpu_custom_call.1} parent=1 // pred_region
      _
    $region5: #{tpu_custom_call.1} parent=1 // pred_fallthru
      _
    // Predicated region
    $region6: #{tpu_custom_call.1} parent=1 // pred_check
      _
    $region7: #{tpu_custom_call.1} parent=1 // pred_check_branch
      %15 = sbr.rel (0) target = $region9
    $region8: #{tpu_custom_call.1} parent=1 // pred_region
      _
    $region9: #{tpu_custom_call.1} parent=1 // pred_fallthru
      _
    // Predicated region
    $region10: #{tpu_custom_call.1} parent=1 // pred_check
      _
    $region11: #{tpu_custom_call.1} parent=1 // pred_check_branch
      %17 = sbr.rel (0) target = $region13
    $region12: #{tpu_custom_call.1} parent=1 // pred_region
      %s19 = ssub.s32 256, 256
      %20 = vsyncadd [#allocation3], %s19
      %s21 = sshll.u32 [#allocation2], 4
      %s22 = int_to_ptr.vmem [resolvable:$true] %s21
      %27 = dma.hbm_to_vmem [thread:$0]  %s2, 256, %s22, [#allocation3], 128, 128, 8
    $region13: #{tpu_custom_call.1} parent=1 // pred_fallthru
      _
    // Predicated region
    $region14: #{tpu_custom_call.1} parent=1 // pred_check
      _
    $region15: #{tpu_custom_call.1} parent=1 // pred_check_branch
      %29 = sbr.rel (0) target = $region17
    $region16: #{tpu_custom_call.1} parent=1 // pred_region
      _
    $region17: #{tpu_custom_call.1} parent=1 // pred_fallthru
      _
    // Predicated region
    $region18: #{tpu_custom_call.1} parent=1 // pred_check
      _
    $region19: #{tpu_custom_call.1} parent=1 // pred_check_branch
      %31 = sbr.rel (0) target = $region21
    $region20: #{tpu_custom_call.1} parent=1 // pred_region
      _
    $region21: #{tpu_custom_call.1} parent=1 // pred_fallthru
      _
    // Predicated region
    $region22: #{tpu_custom_call.1} parent=1 // pred_check
      _
    $region23: #{tpu_custom_call.1} parent=1 // pred_check_branch
      %33 = sbr.rel (0) target = $region25
    $region24: #{tpu_custom_call.1} parent=1 // pred_region
      %34 = dma.done [#allocation3], 256
    $region25: #{tpu_custom_call.1} parent=1 // pred_fallthru
      _
    %v35 = vld [vmem:[%s0] sm:$0xff]
    %v36 = vld [vmem:[%s0 + $0x8] sm:$0xff]
    %v37 = vld [vmem:[#allocation2] sm:$0xff]
    %v38 = vld [vmem:[#allocation2 + $0x8] sm:$0xf]
    %v39 = vld [vmem:[%s1] sm:$0xff]
    %v40 = vld [vmem:[%s1 + $0x8] sm:$0xff]
    %v41 = vld [vmem:[%s3] sm:$0xf]
    %vm42 = vcmask 31744
    %v44 = vsel %vm42, %v39, 0
    %v47 = vsel %vm42, %v40, 0
    %vm49 = vcmask 1043456
    %v51 = vsel %vm49, %v41, 0
    %53 = vmatprep.subr.mxu0 0.0
    %v54 = vand.u32 %v51, 4294901760
    %55 = vmatpush1.msra.mxu0 %v54
    %56 = vmatprep.subr.mxu0 0.0
    %57 = vmatpush1.msra.mxu0 0.0
    %58 = vmatprep.subr.mxu0 0.0
    %59 = vmatpush1.msra.mxu0 0.0
    %60 = vmatprep.subr.mxu0 0.0
    %61 = vmatpush1.msra.mxu0 0.0
    %62 = vmatprep.subr.mxu0 0.0
    %63 = vmatpush1.msra.mxu0 0.0
    %64 = vmatprep.subr.mxu0 0.0
    %65 = vmatpush1.msra.mxu0 0.0
    %66 = vmatprep.subr.mxu0 0.0
    %67 = vmatpush1.msra.mxu0 0.0
    %68 = vmatprep.subr.mxu0 0.0
    %69 = vmatpush1.msra.mxu0 0.0
    %70 = vmatprep.subr.mxu0 0.0
    %71 = vmatpush1.msra.mxu0 0.0
    %72 = vmatprep.subr.mxu0 0.0
    %73 = vmatpush1.msra.mxu0 0.0
    %74 = vmatprep.subr.mxu0 0.0
    %75 = vmatpush1.msra.mxu0 0.0
    %76 = vmatprep.subr.mxu0 0.0
    %77 = vmatpush1.msra.mxu0 0.0
    %78 = vmatprep.subr.mxu0 0.0
    %79 = vmatpush1.msra.mxu0 0.0
    %80 = vmatprep.subr.mxu0 0.0
    %81 = vmatpush1.msra.mxu0 0.0
    %82 = vmatprep.subr.mxu0 0.0
    %83 = vmatpush1.msra.mxu0 0.0
    %84 = vmatprep.subr.mxu0 0.0
    %85 = vmatpush1.msra.mxu0 0.0
    %86 = vmatprep.subr.mxu0 0.0
    %87 = vmatpush1.msra.mxu0 0.0
    %88 = vmatprep.subr.mxu0 0.0
    %89 = vmatpush1.msra.mxu0 0.0
    %90 = vmatprep.subr.mxu0 0.0
    %91 = vmatpush1.msra.mxu0 0.0
    %92 = vmatprep.subr.mxu0 0.0
    %93 = vmatpush1.msra.mxu0 0.0
    %94 = vmatprep.subr.mxu0 0.0
    %95 = vmatpush1.msra.mxu0 0.0
    %96 = vmatprep.subr.mxu0 0.0
    %97 = vmatpush1.msra.mxu0 0.0
    %98 = vmatprep.subr.mxu0 0.0
    %99 = vmatpush1.msra.mxu0 0.0
    %100 = vmatprep.subr.mxu0 0.0
    %101 = vmatpush1.msra.mxu0 0.0
    %102 = vmatprep.subr.mxu0 0.0
    %103 = vmatpush1.msra.mxu0 0.0
    %104 = vmatprep.subr.mxu0 0.0
    %105 = vmatpush1.msra.mxu0 0.0
    %106 = vmatprep.subr.mxu0 0.0
    %107 = vmatpush1.msra.mxu0 0.0
    %108 = vmatprep.subr.mxu0 0.0
    %109 = vmatpush1.msra.mxu0 0.0
    %110 = vmatprep.subr.mxu0 0.0
    %111 = vmatpush1.msra.mxu0 0.0
    %112 = vmatprep.subr.mxu0 0.0
    %113 = vmatpush1.msra.mxu0 0.0
    %114 = vmatprep.subr.mxu0 0.0
    %115 = vmatpush1.msra.mxu0 0.0
    %116 = vmatprep.subr.mxu0 0.0
    %117 = vmatpush1.msra.mxu0 0.0
    %118 = vmatprep.mubr.f32.mxu0 0.0
    %v119 = vand.u32 %v44, 4294901760
    %v120 = vsub.f32 %v44, %v119
    %v121 = vand.u32 %v120, 4294901760
    %v122 = vsub.f32 %v120, %v121
    %v123 = vand.u32 %v122, 4294901760
    %124 = vmatmul.mubr.f32.gmra.mrb[0].mxu0 %v123
    %v125 = vpop.f32.mrb[0].mxu0
    %v126 = vadd.f32 0.0, %v125
    %v127 = vpop.f32.mrb[0].mxu0
    %128 = vmatprep.mubr.f32.mxu0 0.0
    %v129 = vand.u32 %v47, 4294901760
    %v130 = vsub.f32 %v47, %v129
    %v131 = vand.u32 %v130, 4294901760
    %v132 = vsub.f32 %v130, %v131
    %v133 = vand.u32 %v132, 4294901760
    %134 = vmatmul.mubr.f32.gmra.mrb[0].mxu0 %v133
    %v135 = vpop.f32.mrb[0].mxu0
    %v136 = vadd.f32 0.0, %v135
    %v137 = vpop.f32.mrb[0].mxu0
    %138 = vdwg.mxu0
    %139 = vmatprep.subr.mxu0 0.0
    %v140 = vand.u32 %v51, 4294901760
    %v141 = vsub.f32 %v51, %v140
    %v142 = vand.u32 %v141, 4294901760
    %v143 = vsub.f32 %v141, %v142
    %v144 = vand.u32 %v143, 4294901760
    %145 = vmatpush1.msra.mxu0 %v144
    %146 = vmatprep.subr.mxu0 0.0
    %147 = vmatpush1.msra.mxu0 0.0
    %148 = vmatprep.subr.mxu0 0.0
    %149 = vmatpush1.msra.mxu0 0.0
    %150 = vmatprep.subr.mxu0 0.0
    %151 = vmatpush1.msra.mxu0 0.0
    %152 = vmatprep.subr.mxu0 0.0
    %153 = vmatpush1.msra.mxu0 0.0
    %154 = vmatprep.subr.mxu0 0.0
    %155 = vmatpush1.msra.mxu0 0.0
    %156 = vmatprep.subr.mxu0 0.0
    %157 = vmatpush1.msra.mxu0 0.0
    %158 = vmatprep.subr.mxu0 0.0
    %159 = vmatpush1.msra.mxu0 0.0
    %160 = vmatprep.subr.mxu0 0.0
    %161 = vmatpush1.msra.mxu0 0.0
    %162 = vmatprep.subr.mxu0 0.0
    %163 = vmatpush1.msra.mxu0 0.0
    %164 = vmatprep.subr.mxu0 0.0
    %165 = vmatpush1.msra.mxu0 0.0
    %166 = vmatprep.subr.mxu0 0.0
    %167 = vmatpush1.msra.mxu0 0.0
    %168 = vmatprep.subr.mxu0 0.0
    %169 = vmatpush1.msra.mxu0 0.0
    %170 = vmatprep.subr.mxu0 0.0
    %171 = vmatpush1.msra.mxu0 0.0
    %172 = vmatprep.subr.mxu0 0.0
    %173 = vmatpush1.msra.mxu0 0.0
    %174 = vmatprep.subr.mxu0 0.0
    %175 = vmatpush1.msra.mxu0 0.0
    %176 = vmatprep.subr.mxu0 0.0
    %177 = vmatpush1.msra.mxu0 0.0
    %178 = vmatprep.subr.mxu0 0.0
    %179 = vmatpush1.msra.mxu0 0.0
    %180 = vmatprep.subr.mxu0 0.0
    %181 = vmatpush1.msra.mxu0 0.0
    %182 = vmatprep.subr.mxu0 0.0
    %183 = vmatpush1.msra.mxu0 0.0
    %184 = vmatprep.subr.mxu0 0.0
    %185 = vmatpush1.msra.mxu0 0.0
    %186 = vmatprep.subr.mxu0 0.0
    %187 = vmatpush1.msra.mxu0 0.0
    %188 = vmatprep.subr.mxu0 0.0
    %189 = vmatpush1.msra.mxu0 0.0
    %190 = vmatprep.subr.mxu0 0.0
    %191 = vmatpush1.msra.mxu0 0.0
    %192 = vmatprep.subr.mxu0 0.0
    %193 = vmatpush1.msra.mxu0 0.0
    %194 = vmatprep.subr.mxu0 0.0
    %195 = vmatpush1.msra.mxu0 0.0
    %196 = vmatprep.subr.mxu0 0.0
    %197 = vmatpush1.msra.mxu0 0.0
    %198 = vmatprep.subr.mxu0 0.0
    %199 = vmatpush1.msra.mxu0 0.0
    %200 = vmatprep.subr.mxu0 0.0
    %201 = vmatpush1.msra.mxu0 0.0
    %202 = vmatprep.subr.mxu0 0.0
    %203 = vmatpush1.msra.mxu0 0.0
    %204 = vmatprep.subr.mxu0 0.0
    %205 = vmatpush1.msra.mxu0 0.0
    %206 = vmatprep.subr.mxu0 0.0
    %207 = vmatpush1.msra.mxu0 0.0
    %208 = vmatprep.mubr.f32.mxu0 0.0
    %v209 = vand.u32 %v44, 4294901760
    %210 = vmatmul.mubr.f32.gmra.mrb[0].mxu0 %v209
    %v211 = vpop.f32.mrb[0].mxu0
    %v212 = vadd.f32 %v126, %v211
    %v213 = vpop.f32.mrb[0].mxu0
    %214 = vmatprep.mubr.f32.mxu0 0.0
    %v215 = vand.u32 %v47, 4294901760
    %216 = vmatmul.mubr.f32.gmra.mrb[0].mxu0 %v215
    %v217 = vpop.f32.mrb[0].mxu0
    %v218 = vadd.f32 %v136, %v217
    %v219 = vpop.f32.mrb[0].mxu0
    %220 = vdwg.mxu0
    %221 = vmatprep.subr.mxu0 0.0
    %v222 = vand.u32 %v51, 4294901760
    %v223 = vsub.f32 %v51, %v222
    %224 = vmatpush1.msra.mxu0 %v223
    %225 = vmatprep.subr.mxu0 0.0
    %226 = vmatpush1.msra.mxu0 0.0
    %227 = vmatprep.subr.mxu0 0.0
    %228 = vmatpush1.msra.mxu0 0.0
    %229 = vmatprep.subr.mxu0 0.0
    %230 = vmatpush1.msra.mxu0 0.0
    %231 = vmatprep.subr.mxu0 0.0
    %232 = vmatpush1.msra.mxu0 0.0
    %233 = vmatprep.subr.mxu0 0.0
    %234 = vmatpush1.msra.mxu0 0.0
    %235 = vmatprep.subr.mxu0 0.0
    %236 = vmatpush1.msra.mxu0 0.0
    %237 = vmatprep.subr.mxu0 0.0
    %238 = vmatpush1.msra.mxu0 0.0
    %239 = vmatprep.subr.mxu0 0.0
    %240 = vmatpush1.msra.mxu0 0.0
    %241 = vmatprep.subr.mxu0 0.0
    %242 = vmatpush1.msra.mxu0 0.0
    %243 = vmatprep.subr.mxu0 0.0
    %244 = vmatpush1.msra.mxu0 0.0
    %245 = vmatprep.subr.mxu0 0.0
    %246 = vmatpush1.msra.mxu0 0.0
    %247 = vmatprep.subr.mxu0 0.0
    %248 = vmatpush1.msra.mxu0 0.0
    %249 = vmatprep.subr.mxu0 0.0
    %250 = vmatpush1.msra.mxu0 0.0
    %251 = vmatprep.subr.mxu0 0.0
    %252 = vmatpush1.msra.mxu0 0.0
    %253 = vmatprep.subr.mxu0 0.0
    %254 = vmatpush1.msra.mxu0 0.0
    %255 = vmatprep.subr.mxu0 0.0
    %256 = vmatpush1.msra.mxu0 0.0
    %257 = vmatprep.subr.mxu0 0.0
    %258 = vmatpush1.msra.mxu0 0.0
    %259 = vmatprep.subr.mxu0 0.0
    %260 = vmatpush1.msra.mxu0 0.0
    %261 = vmatprep.subr.mxu0 0.0
    %262 = vmatpush1.msra.mxu0 0.0
    %263 = vmatprep.subr.mxu0 0.0
    %264 = vmatpush1.msra.mxu0 0.0
    %265 = vmatprep.subr.mxu0 0.0
    %266 = vmatpush1.msra.mxu0 0.0
    %267 = vmatprep.subr.mxu0 0.0
    %268 = vmatpush1.msra.mxu0 0.0
    %269 = vmatprep.subr.mxu0 0.0
    %270 = vmatpush1.msra.mxu0 0.0
    %271 = vmatprep.subr.mxu0 0.0
    %272 = vmatpush1.msra.mxu0 0.0
    %273 = vmatprep.subr.mxu0 0.0
    %274 = vmatpush1.msra.mxu0 0.0
    %275 = vmatprep.subr.mxu0 0.0
    %276 = vmatpush1.msra.mxu0 0.0
    %277 = vmatprep.subr.mxu0 0.0
    %278 = vmatpush1.msra.mxu0 0.0
    %279 = vmatprep.subr.mxu0 0.0
    %280 = vmatpush1.msra.mxu0 0.0
    %281 = vmatprep.subr.mxu0 0.0
    %282 = vmatpush1.msra.mxu0 0.0
    %283 = vmatprep.subr.mxu0 0.0
    %284 = vmatpush1.msra.mxu0 0.0
    %285 = vmatprep.subr.mxu0 0.0
    %286 = vmatpush1.msra.mxu0 0.0
    %287 = vmatprep.mubr.f32.mxu0 0.0
    %v288 = vand.u32 %v44, 4294901760
    %v289 = vsub.f32 %v44, %v288
    %290 = vmatmul.mubr.f32.gmra.mrb[0].mxu0 %v289
    %v291 = vpop.f32.mrb[0].mxu0
    %v292 = vadd.f32 %v212, %v291
    %v293 = vpop.f32.mrb[0].mxu0
    %294 = vmatprep.mubr.f32.mxu0 0.0
    %v295 = vand.u32 %v47, 4294901760
    %v296 = vsub.f32 %v47, %v295
    %297 = vmatmul.mubr.f32.gmra.mrb[0].mxu0 %v296
    %v298 = vpop.f32.mrb[0].mxu0
    %v299 = vadd.f32 %v218, %v298
    %v300 = vpop.f32.mrb[0].mxu0
    %301 = vdwg.mxu0
    %302 = vmatprep.subr.mxu0 0.0
    %v303 = vand.u32 %v51, 4294901760
    %304 = vmatpush1.msra.mxu0 %v303
    %305 = vmatprep.subr.mxu0 0.0
    %306 = vmatpush1.msra.mxu0 0.0
    %307 = vmatprep.subr.mxu0 0.0
    %308 = vmatpush1.msra.mxu0 0.0
    %309 = vmatprep.subr.mxu0 0.0
    %310 = vmatpush1.msra.mxu0 0.0
    %311 = vmatprep.subr.mxu0 0.0
    %312 = vmatpush1.msra.mxu0 0.0
    %313 = vmatprep.subr.mxu0 0.0
    %314 = vmatpush1.msra.mxu0 0.0
    %315 = vmatprep.subr.mxu0 0.0
    %316 = vmatpush1.msra.mxu0 0.0
    %317 = vmatprep.subr.mxu0 0.0
    %318 = vmatpush1.msra.mxu0 0.0
    %319 = vmatprep.subr.mxu0 0.0
    %320 = vmatpush1.msra.mxu0 0.0
    %321 = vmatprep.subr.mxu0 0.0
    %322 = vmatpush1.msra.mxu0 0.0
    %323 = vmatprep.subr.mxu0 0.0
    %324 = vmatpush1.msra.mxu0 0.0
    %325 = vmatprep.subr.mxu0 0.0
    %326 = vmatpush1.msra.mxu0 0.0
    %327 = vmatprep.subr.mxu0 0.0
    %328 = vmatpush1.msra.mxu0 0.0
    %329 = vmatprep.subr.mxu0 0.0
    %330 = vmatpush1.msra.mxu0 0.0
    %331 = vmatprep.subr.mxu0 0.0
    %332 = vmatpush1.msra.mxu0 0.0
    %333 = vmatprep.subr.mxu0 0.0
    %334 = vmatpush1.msra.mxu0 0.0
    %335 = vmatprep.subr.mxu0 0.0
    %336 = vmatpush1.msra.mxu0 0.0
    %337 = vmatprep.subr.mxu0 0.0
    %338 = vmatpush1.msra.mxu0 0.0
    %339 = vmatprep.subr.mxu0 0.0
    %340 = vmatpush1.msra.mxu0 0.0
    %341 = vmatprep.subr.mxu0 0.0
    %342 = vmatpush1.msra.mxu0 0.0
    %343 = vmatprep.subr.mxu0 0.0
    %344 = vmatpush1.msra.mxu0 0.0
    %345 = vmatprep.subr.mxu0 0.0
    %346 = vmatpush1.msra.mxu0 0.0
    %347 = vmatprep.subr.mxu0 0.0
    %348 = vmatpush1.msra.mxu0 0.0
    %349 = vmatprep.subr.mxu0 0.0
    %350 = vmatpush1.msra.mxu0 0.0
    %351 = vmatprep.subr.mxu0 0.0
    %352 = vmatpush1.msra.mxu0 0.0
    %353 = vmatprep.subr.mxu0 0.0
    %354 = vmatpush1.msra.mxu0 0.0
    %355 = vmatprep.subr.mxu0 0.0
    %356 = vmatpush1.msra.mxu0 0.0
    %357 = vmatprep.subr.mxu0 0.0
    %358 = vmatpush1.msra.mxu0 0.0
    %359 = vmatprep.subr.mxu0 0.0
    %360 = vmatpush1.msra.mxu0 0.0
    %361 = vmatprep.subr.mxu0 0.0
    %362 = vmatpush1.msra.mxu0 0.0
    %363 = vmatprep.subr.mxu0 0.0
    %364 = vmatpush1.msra.mxu0 0.0
    %365 = vmatprep.subr.mxu0 0.0
    %366 = vmatpush1.msra.mxu0 0.0
    %367 = vmatprep.mubr.f32.mxu0 0.0
    %v368 = vand.u32 %v44, 4294901760
    %v369 = vsub.f32 %v44, %v368
    %v370 = vand.u32 %v369, 4294901760
    %371 = vmatmul.mubr.f32.gmra.mrb[0].mxu0 %v370
    %v372 = vpop.f32.mrb[0].mxu0
    %v373 = vadd.f32 %v292, %v372
    %v374 = vpop.f32.mrb[0].mxu0
    %375 = vmatprep.mubr.f32.mxu0 0.0
    %v376 = vand.u32 %v47, 4294901760
    %v377 = vsub.f32 %v47, %v376
    %v378 = vand.u32 %v377, 4294901760
    %379 = vmatmul.mubr.f32.gmra.mrb[0].mxu0 %v378
    %v380 = vpop.f32.mrb[0].mxu0
    %v381 = vadd.f32 %v299, %v380
    %v382 = vpop.f32.mrb[0].mxu0
    %383 = vdwg.mxu0
    %384 = vmatprep.subr.mxu0 0.0
    %v385 = vand.u32 %v51, 4294901760
    %v386 = vsub.f32 %v51, %v385
    %v387 = vand.u32 %v386, 4294901760
    %388 = vmatpush1.msra.mxu0 %v387
    %389 = vmatprep.subr.mxu0 0.0
    %390 = vmatpush1.msra.mxu0 0.0
    %391 = vmatprep.subr.mxu0 0.0
    %392 = vmatpush1.msra.mxu0 0.0
    %393 = vmatprep.subr.mxu0 0.0
    %394 = vmatpush1.msra.mxu0 0.0
    %395 = vmatprep.subr.mxu0 0.0
    %396 = vmatpush1.msra.mxu0 0.0
    %397 = vmatprep.subr.mxu0 0.0
    %398 = vmatpush1.msra.mxu0 0.0
    %399 = vmatprep.subr.mxu0 0.0
    %400 = vmatpush1.msra.mxu0 0.0
    %401 = vmatprep.subr.mxu0 0.0
    %402 = vmatpush1.msra.mxu0 0.0
    %403 = vmatprep.subr.mxu0 0.0
    %404 = vmatpush1.msra.mxu0 0.0
    %405 = vmatprep.subr.mxu0 0.0
    %406 = vmatpush1.msra.mxu0 0.0
    %407 = vmatprep.subr.mxu0 0.0
    %408 = vmatpush1.msra.mxu0 0.0
    %409 = vmatprep.subr.mxu0 0.0
    %410 = vmatpush1.msra.mxu0 0.0
    %411 = vmatprep.subr.mxu0 0.0
    %412 = vmatpush1.msra.mxu0 0.0
    %413 = vmatprep.subr.mxu0 0.0
    %414 = vmatpush1.msra.mxu0 0.0
    %415 = vmatprep.subr.mxu0 0.0
    %416 = vmatpush1.msra.mxu0 0.0
    %417 = vmatprep.subr.mxu0 0.0
    %418 = vmatpush1.msra.mxu0 0.0
    %419 = vmatprep.subr.mxu0 0.0
    %420 = vmatpush1.msra.mxu0 0.0
    %421 = vmatprep.subr.mxu0 0.0
    %422 = vmatpush1.msra.mxu0 0.0
    %423 = vmatprep.subr.mxu0 0.0
    %424 = vmatpush1.msra.mxu0 0.0
    %425 = vmatprep.subr.mxu0 0.0
    %426 = vmatpush1.msra.mxu0 0.0
    %427 = vmatprep.subr.mxu0 0.0
    %428 = vmatpush1.msra.mxu0 0.0
    %429 = vmatprep.subr.mxu0 0.0
    %430 = vmatpush1.msra.mxu0 0.0
    %431 = vmatprep.subr.mxu0 0.0
    %432 = vmatpush1.msra.mxu0 0.0
    %433 = vmatprep.subr.mxu0 0.0
    %434 = vmatpush1.msra.mxu0 0.0
    %435 = vmatprep.subr.mxu0 0.0
    %436 = vmatpush1.msra.mxu0 0.0
    %437 = vmatprep.subr.mxu0 0.0
    %438 = vmatpush1.msra.mxu0 0.0
    %439 = vmatprep.subr.mxu0 0.0
    %440 = vmatpush1.msra.mxu0 0.0
    %441 = vmatprep.subr.mxu0 0.0
    %442 = vmatpush1.msra.mxu0 0.0
    %443 = vmatprep.subr.mxu0 0.0
    %444 = vmatpush1.msra.mxu0 0.0
    %445 = vmatprep.subr.mxu0 0.0
    %446 = vmatpush1.msra.mxu0 0.0
    %447 = vmatprep.subr.mxu0 0.0
    %448 = vmatpush1.msra.mxu0 0.0
    %449 = vmatprep.subr.mxu0 0.0
    %450 = vmatpush1.msra.mxu0 0.0
    %451 = vmatprep.mubr.f32.mxu0 0.0
    %v452 = vand.u32 %v44, 4294901760
    %453 = vmatmul.mubr.f32.gmra.mrb[0].mxu0 %v452
    %v454 = vpop.f32.mrb[0].mxu0
    %v455 = vadd.f32 %v373, %v454
    %v456 = vpop.f32.mrb[0].mxu0
    %457 = vmatprep.mubr.f32.mxu0 0.0
    %v458 = vand.u32 %v47, 4294901760
    %459 = vmatmul.mubr.f32.gmra.mrb[0].mxu0 %v458
    %v460 = vpop.f32.mrb[0].mxu0
    %v461 = vadd.f32 %v381, %v460
    %v462 = vpop.f32.mrb[0].mxu0
    %463 = vdwg.mxu0
    %464 = vmatprep.subr.mxu0 0.0
    %v465 = vand.u32 %v51, 4294901760
    %466 = vmatpush1.msra.mxu0 %v465
    %467 = vmatprep.subr.mxu0 0.0
    %468 = vmatpush1.msra.mxu0 0.0
    %469 = vmatprep.subr.mxu0 0.0
    %470 = vmatpush1.msra.mxu0 0.0
    %471 = vmatprep.subr.mxu0 0.0
    %472 = vmatpush1.msra.mxu0 0.0
    %473 = vmatprep.subr.mxu0 0.0
    %474 = vmatpush1.msra.mxu0 0.0
    %475 = vmatprep.subr.mxu0 0.0
    %476 = vmatpush1.msra.mxu0 0.0
    %477 = vmatprep.subr.mxu0 0.0
    %478 = vmatpush1.msra.mxu0 0.0
    %479 = vmatprep.subr.mxu0 0.0
    %480 = vmatpush1.msra.mxu0 0.0
    %481 = vmatprep.subr.mxu0 0.0
    %482 = vmatpush1.msra.mxu0 0.0
    %483 = vmatprep.subr.mxu0 0.0
    %484 = vmatpush1.msra.mxu0 0.0
    %485 = vmatprep.subr.mxu0 0.0
    %486 = vmatpush1.msra.mxu0 0.0
    %487 = vmatprep.subr.mxu0 0.0
    %488 = vmatpush1.msra.mxu0 0.0
    %489 = vmatprep.subr.mxu0 0.0
    %490 = vmatpush1.msra.mxu0 0.0
    %491 = vmatprep.subr.mxu0 0.0
    %492 = vmatpush1.msra.mxu0 0.0
    %493 = vmatprep.subr.mxu0 0.0
    %494 = vmatpush1.msra.mxu0 0.0
    %495 = vmatprep.subr.mxu0 0.0
    %496 = vmatpush1.msra.mxu0 0.0
    %497 = vmatprep.subr.mxu0 0.0
    %498 = vmatpush1.msra.mxu0 0.0
    %499 = vmatprep.subr.mxu0 0.0
    %500 = vmatpush1.msra.mxu0 0.0
    %501 = vmatprep.subr.mxu0 0.0
    %502 = vmatpush1.msra.mxu0 0.0
    %503 = vmatprep.subr.mxu0 0.0
    %504 = vmatpush1.msra.mxu0 0.0
    %505 = vmatprep.subr.mxu0 0.0
    %506 = vmatpush1.msra.mxu0 0.0
    %507 = vmatprep.subr.mxu0 0.0
    %508 = vmatpush1.msra.mxu0 0.0
    %509 = vmatprep.subr.mxu0 0.0
    %510 = vmatpush1.msra.mxu0 0.0
    %511 = vmatprep.subr.mxu0 0.0
    %512 = vmatpush1.msra.mxu0 0.0
    %513 = vmatprep.subr.mxu0 0.0
    %514 = vmatpush1.msra.mxu0 0.0
    %515 = vmatprep.subr.mxu0 0.0
    %516 = vmatpush1.msra.mxu0 0.0
    %517 = vmatprep.subr.mxu0 0.0
    %518 = vmatpush1.msra.mxu0 0.0
    %519 = vmatprep.subr.mxu0 0.0
    %520 = vmatpush1.msra.mxu0 0.0
    %521 = vmatprep.subr.mxu0 0.0
    %522 = vmatpush1.msra.mxu0 0.0
    %523 = vmatprep.subr.mxu0 0.0
    %524 = vmatpush1.msra.mxu0 0.0
    %525 = vmatprep.subr.mxu0 0.0
    %526 = vmatpush1.msra.mxu0 0.0
    %527 = vmatprep.subr.mxu0 0.0
    %528 = vmatpush1.msra.mxu0 0.0
    %529 = vmatprep.mubr.f32.mxu0 0.0
    %v530 = vand.u32 %v44, 4294901760
    %531 = vmatmul.mubr.f32.gmra.mrb[0].mxu0 %v530
    %v532 = vpop.f32.mrb[0].mxu0
    %v533 = vadd.f32 %v455, %v532
    %v534 = vpop.f32.mrb[0].mxu0
    %535 = vmatprep.mubr.f32.mxu0 0.0
    %v536 = vand.u32 %v47, 4294901760
    %537 = vmatmul.mubr.f32.gmra.mrb[0].mxu0 %v536
    %v538 = vpop.f32.mrb[0].mxu0
    %v539 = vadd.f32 %v461, %v538
    %v540 = vpop.f32.mrb[0].mxu0
    %541 = vdwg.mxu0
    %vm542 = vcmask 97280
    %v544 = vsel %vm542, %v35, 0
    %v547 = vsel %vm542, %v36, 0
    %v550 = vsel %vm49, %v38, 0
    %552 = vmatprep.subr.mxu0 0.0
    %v553 = vand.u32 %v37, 4294901760
    %554 = vmatpush1.msra.mxu0 %v553
    %555 = vmatprep.subr.mxu0 0.0
    %v556 = vand.u32 %v550, 4294901760
    %557 = vmatpush1.msra.mxu0 %v556
    %558 = vmatprep.subr.mxu0 0.0
    %559 = vmatpush1.msra.mxu0 0.0
    %560 = vmatprep.subr.mxu0 0.0
    %561 = vmatpush1.msra.mxu0 0.0
    %562 = vmatprep.subr.mxu0 0.0
    %563 = vmatpush1.msra.mxu0 0.0
    %564 = vmatprep.subr.mxu0 0.0
    %565 = vmatpush1.msra.mxu0 0.0
    %566 = vmatprep.subr.mxu0 0.0
    %567 = vmatpush1.msra.mxu0 0.0
    %568 = vmatprep.subr.mxu0 0.0
    %569 = vmatpush1.msra.mxu0 0.0
    %570 = vmatprep.subr.mxu0 0.0
    %571 = vmatpush1.msra.mxu0 0.0
    %572 = vmatprep.subr.mxu0 0.0
    %573 = vmatpush1.msra.mxu0 0.0
    %574 = vmatprep.subr.mxu0 0.0
    %575 = vmatpush1.msra.mxu0 0.0
    %576 = vmatprep.subr.mxu0 0.0
    %577 = vmatpush1.msra.mxu0 0.0
    %578 = vmatprep.subr.mxu0 0.0
    %579 = vmatpush1.msra.mxu0 0.0
    %580 = vmatprep.subr.mxu0 0.0
    %581 = vmatpush1.msra.mxu0 0.0
    %582 = vmatprep.subr.mxu0 0.0
    %583 = vmatpush1.msra.mxu0 0.0
    %584 = vmatprep.subr.mxu0 0.0
    %585 = vmatpush1.msra.mxu0 0.0
    %586 = vmatprep.subr.mxu0 0.0
    %587 = vmatpush1.msra.mxu0 0.0
    %588 = vmatprep.subr.mxu0 0.0
    %589 = vmatpush1.msra.mxu0 0.0
    %590 = vmatprep.subr.mxu0 0.0
    %591 = vmatpush1.msra.mxu0 0.0
    %592 = vmatprep.subr.mxu0 0.0
    %593 = vmatpush1.msra.mxu0 0.0
    %594 = vmatprep.subr.mxu0 0.0
    %595 = vmatpush1.msra.mxu0 0.0
    %596 = vmatprep.subr.mxu0 0.0
    %597 = vmatpush1.msra.mxu0 0.0
    %598 = vmatprep.subr.mxu0 0.0
    %599 = vmatpush1.msra.mxu0 0.0
    %600 = vmatprep.subr.mxu0 0.0
    %601 = vmatpush1.msra.mxu0 0.0
    %602 = vmatprep.subr.mxu0 0.0
    %603 = vmatpush1.msra.mxu0 0.0
    %604 = vmatprep.subr.mxu0 0.0
    %605 = vmatpush1.msra.mxu0 0.0
    %606 = vmatprep.subr.mxu0 0.0
    %607 = vmatpush1.msra.mxu0 0.0
    %608 = vmatprep.subr.mxu0 0.0
    %609 = vmatpush1.msra.mxu0 0.0
    %610 = vmatprep.subr.mxu0 0.0
    %611 = vmatpush1.msra.mxu0 0.0
    %612 = vmatprep.subr.mxu0 0.0
    %613 = vmatpush1.msra.mxu0 0.0
    %614 = vmatprep.subr.mxu0 0.0
    %615 = vmatpush1.msra.mxu0 0.0
    %616 = vmatprep.subr.mxu0 0.0
    %617 = vmatpush1.msra.mxu0 0.0
    %618 = vmatprep.mubr.f32.mxu0 0.0
    %v619 = vand.u32 %v544, 4294901760
    %v620 = vsub.f32 %v544, %v619
    %v621 = vand.u32 %v620, 4294901760
    %v622 = vsub.f32 %v620, %v621
    %v623 = vand.u32 %v622, 4294901760
    %624 = vmatmul.mubr.f32.gmra.mrb[0].mxu0 %v623
    %v625 = vpop.f32.mrb[0].mxu0
    %v626 = vadd.f32 %v533, %v625
    %v627 = vpop.f32.mrb[0].mxu0
    %628 = vmatprep.mubr.f32.mxu0 0.0
    %v629 = vand.u32 %v547, 4294901760
    %v630 = vsub.f32 %v547, %v629
    %v631 = vand.u32 %v630, 4294901760
    %v632 = vsub.f32 %v630, %v631
    %v633 = vand.u32 %v632, 4294901760
    %634 = vmatmul.mubr.f32.gmra.mrb[0].mxu0 %v633
    %v635 = vpop.f32.mrb[0].mxu0
    %v636 = vadd.f32 %v539, %v635
    %v637 = vpop.f32.mrb[0].mxu0
    %638 = vdwg.mxu0
    %639 = vmatprep.subr.mxu0 0.0
    %v640 = vand.u32 %v37, 4294901760
    %v641 = vsub.f32 %v37, %v640
    %v642 = vand.u32 %v641, 4294901760
    %v643 = vsub.f32 %v641, %v642
    %v644 = vand.u32 %v643, 4294901760
    %645 = vmatpush1.msra.mxu0 %v644
    %646 = vmatprep.subr.mxu0 0.0
    %v647 = vand.u32 %v550, 4294901760
    %v648 = vsub.f32 %v550, %v647
    %v649 = vand.u32 %v648, 4294901760
    %v650 = vsub.f32 %v648, %v649
    %v651 = vand.u32 %v650, 4294901760
    %652 = vmatpush1.msra.mxu0 %v651
    %653 = vmatprep.subr.mxu0 0.0
    %654 = vmatpush1.msra.mxu0 0.0
    %655 = vmatprep.subr.mxu0 0.0
    %656 = vmatpush1.msra.mxu0 0.0
    %657 = vmatprep.subr.mxu0 0.0
    %658 = vmatpush1.msra.mxu0 0.0
    %659 = vmatprep.subr.mxu0 0.0
    %660 = vmatpush1.msra.mxu0 0.0
    %661 = vmatprep.subr.mxu0 0.0
    %662 = vmatpush1.msra.mxu0 0.0
    %663 = vmatprep.subr.mxu0 0.0
    %664 = vmatpush1.msra.mxu0 0.0
    %665 = vmatprep.subr.mxu0 0.0
    %666 = vmatpush1.msra.mxu0 0.0
    %667 = vmatprep.subr.mxu0 0.0
    %668 = vmatpush1.msra.mxu0 0.0
    %669 = vmatprep.subr.mxu0 0.0
    %670 = vmatpush1.msra.mxu0 0.0
    %671 = vmatprep.subr.mxu0 0.0
    %672 = vmatpush1.msra.mxu0 0.0
    %673 = vmatprep.subr.mxu0 0.0
    %674 = vmatpush1.msra.mxu0 0.0
    %675 = vmatprep.subr.mxu0 0.0
    %676 = vmatpush1.msra.mxu0 0.0
    %677 = vmatprep.subr.mxu0 0.0
    %678 = vmatpush1.msra.mxu0 0.0
    %679 = vmatprep.subr.mxu0 0.0
    %680 = vmatpush1.msra.mxu0 0.0
    %681 = vmatprep.subr.mxu0 0.0
    %682 = vmatpush1.msra.mxu0 0.0
    %683 = vmatprep.subr.mxu0 0.0
    %684 = vmatpush1.msra.mxu0 0.0
    %685 = vmatprep.subr.mxu0 0.0
    %686 = vmatpush1.msra.mxu0 0.0
    %687 = vmatprep.subr.mxu0 0.0
    %688 = vmatpush1.msra.mxu0 0.0
    %689 = vmatprep.subr.mxu0 0.0
    %690 = vmatpush1.msra.mxu0 0.0
    %691 = vmatprep.subr.mxu0 0.0
    %692 = vmatpush1.msra.mxu0 0.0
    %693 = vmatprep.subr.mxu0 0.0
    %694 = vmatpush1.msra.mxu0 0.0
    %695 = vmatprep.subr.mxu0 0.0
    %696 = vmatpush1.msra.mxu0 0.0
    %697 = vmatprep.subr.mxu0 0.0
    %698 = vmatpush1.msra.mxu0 0.0
    %699 = vmatprep.subr.mxu0 0.0
    %700 = vmatpush1.msra.mxu0 0.0
    %701 = vmatprep.subr.mxu0 0.0
    %702 = vmatpush1.msra.mxu0 0.0
    %703 = vmatprep.subr.mxu0 0.0
    %704 = vmatpush1.msra.mxu0 0.0
    %705 = vmatprep.subr.mxu0 0.0
    %706 = vmatpush1.msra.mxu0 0.0
    %707 = vmatprep.subr.mxu0 0.0
    %708 = vmatpush1.msra.mxu0 0.0
    %709 = vmatprep.subr.mxu0 0.0
    %710 = vmatpush1.msra.mxu0 0.0
    %711 = vmatprep.subr.mxu0 0.0
    %712 = vmatpush1.msra.mxu0 0.0
    %713 = vmatprep.mubr.f32.mxu0 0.0
    %v714 = vand.u32 %v544, 4294901760
    %715 = vmatmul.mubr.f32.gmra.mrb[0].mxu0 %v714
    %v716 = vpop.f32.mrb[0].mxu0
    %v717 = vadd.f32 %v626, %v716
    %v718 = vpop.f32.mrb[0].mxu0
    %719 = vmatprep.mubr.f32.mxu0 0.0
    %v720 = vand.u32 %v547, 4294901760
    %721 = vmatmul.mubr.f32.gmra.mrb[0].mxu0 %v720
    %v722 = vpop.f32.mrb[0].mxu0
    %v723 = vadd.f32 %v636, %v722
    %v724 = vpop.f32.mrb[0].mxu0
    %725 = vdwg.mxu0
    %726 = vmatprep.subr.mxu0 0.0
    %v727 = vand.u32 %v37, 4294901760
    %v728 = vsub.f32 %v37, %v727
    %729 = vmatpush1.msra.mxu0 %v728
    %730 = vmatprep.subr.mxu0 0.0
    %v731 = vand.u32 %v550, 4294901760
    %v732 = vsub.f32 %v550, %v731
    %733 = vmatpush1.msra.mxu0 %v732
    %734 = vmatprep.subr.mxu0 0.0
    %735 = vmatpush1.msra.mxu0 0.0
    %736 = vmatprep.subr.mxu0 0.0
    %737 = vmatpush1.msra.mxu0 0.0
    %738 = vmatprep.subr.mxu0 0.0
    %739 = vmatpush1.msra.mxu0 0.0
    %740 = vmatprep.subr.mxu0 0.0
    %741 = vmatpush1.msra.mxu0 0.0
    %742 = vmatprep.subr.mxu0 0.0
    %743 = vmatpush1.msra.mxu0 0.0
    %744 = vmatprep.subr.mxu0 0.0
    %745 = vmatpush1.msra.mxu0 0.0
    %746 = vmatprep.subr.mxu0 0.0
    %747 = vmatpush1.msra.mxu0 0.0
    %748 = vmatprep.subr.mxu0 0.0
    %749 = vmatpush1.msra.mxu0 0.0
    %750 = vmatprep.subr.mxu0 0.0
    %751 = vmatpush1.msra.mxu0 0.0
    %752 = vmatprep.subr.mxu0 0.0
    %753 = vmatpush1.msra.mxu0 0.0
    %754 = vmatprep.subr.mxu0 0.0
    %755 = vmatpush1.msra.mxu0 0.0
    %756 = vmatprep.subr.mxu0 0.0
    %757 = vmatpush1.msra.mxu0 0.0
    %758 = vmatprep.subr.mxu0 0.0
    %759 = vmatpush1.msra.mxu0 0.0
    %760 = vmatprep.subr.mxu0 0.0
    %761 = vmatpush1.msra.mxu0 0.0
    %762 = vmatprep.subr.mxu0 0.0
    %763 = vmatpush1.msra.mxu0 0.0
    %764 = vmatprep.subr.mxu0 0.0
    %765 = vmatpush1.msra.mxu0 0.0
    %766 = vmatprep.subr.mxu0 0.0
    %767 = vmatpush1.msra.mxu0 0.0
    %768 = vmatprep.subr.mxu0 0.0
    %769 = vmatpush1.msra.mxu0 0.0
    %770 = vmatprep.subr.mxu0 0.0
    %771 = vmatpush1.msra.mxu0 0.0
    %772 = vmatprep.subr.mxu0 0.0
    %773 = vmatpush1.msra.mxu0 0.0
    %774 = vmatprep.subr.mxu0 0.0
    %775 = vmatpush1.msra.mxu0 0.0
    %776 = vmatprep.subr.mxu0 0.0
    %777 = vmatpush1.msra.mxu0 0.0
    %778 = vmatprep.subr.mxu0 0.0
    %779 = vmatpush1.msra.mxu0 0.0
    %780 = vmatprep.subr.mxu0 0.0
    %781 = vmatpush1.msra.mxu0 0.0
    %782 = vmatprep.subr.mxu0 0.0
    %783 = vmatpush1.msra.mxu0 0.0
    %784 = vmatprep.subr.mxu0 0.0
    %785 = vmatpush1.msra.mxu0 0.0
    %786 = vmatprep.subr.mxu0 0.0
    %787 = vmatpush1.msra.mxu0 0.0
    %788 = vmatprep.subr.mxu0 0.0
    %789 = vmatpush1.msra.mxu0 0.0
    %790 = vmatprep.subr.mxu0 0.0
    %791 = vmatpush1.msra.mxu0 0.0
    %792 = vmatprep.subr.mxu0 0.0
    %793 = vmatpush1.msra.mxu0 0.0
    %794 = vmatprep.mubr.f32.mxu0 0.0
    %v795 = vand.u32 %v544, 4294901760
    %v796 = vsub.f32 %v544, %v795
    %797 = vmatmul.mubr.f32.gmra.mrb[0].mxu0 %v796
    %v798 = vpop.f32.mrb[0].mxu0
    %v799 = vadd.f32 %v717, %v798
    %v800 = vpop.f32.mrb[0].mxu0
    %801 = vmatprep.mubr.f32.mxu0 0.0
    %v802 = vand.u32 %v547, 4294901760
    %v803 = vsub.f32 %v547, %v802
    %804 = vmatmul.mubr.f32.gmra.mrb[0].mxu0 %v803
    %v805 = vpop.f32.mrb[0].mxu0
    %v806 = vadd.f32 %v723, %v805
    %v807 = vpop.f32.mrb[0].mxu0
    %808 = vdwg.mxu0
    %809 = vmatprep.subr.mxu0 0.0
    %v810 = vand.u32 %v37, 4294901760
    %811 = vmatpush1.msra.mxu0 %v810
    %812 = vmatprep.subr.mxu0 0.0
    %v813 = vand.u32 %v550, 4294901760
    %814 = vmatpush1.msra.mxu0 %v813
    %815 = vmatprep.subr.mxu0 0.0
    %816 = vmatpush1.msra.mxu0 0.0
    %817 = vmatprep.subr.mxu0 0.0
    %818 = vmatpush1.msra.mxu0 0.0
    %819 = vmatprep.subr.mxu0 0.0
    %820 = vmatpush1.msra.mxu0 0.0
    %821 = vmatprep.subr.mxu0 0.0
    %822 = vmatpush1.msra.mxu0 0.0
    %823 = vmatprep.subr.mxu0 0.0
    %824 = vmatpush1.msra.mxu0 0.0
    %825 = vmatprep.subr.mxu0 0.0
    %826 = vmatpush1.msra.mxu0 0.0
    %827 = vmatprep.subr.mxu0 0.0
    %828 = vmatpush1.msra.mxu0 0.0
    %829 = vmatprep.subr.mxu0 0.0
    %830 = vmatpush1.msra.mxu0 0.0
    %831 = vmatprep.subr.mxu0 0.0
    %832 = vmatpush1.msra.mxu0 0.0
    %833 = vmatprep.subr.mxu0 0.0
    %834 = vmatpush1.msra.mxu0 0.0
    %835 = vmatprep.subr.mxu0 0.0
    %836 = vmatpush1.msra.mxu0 0.0
    %837 = vmatprep.subr.mxu0 0.0
    %838 = vmatpush1.msra.mxu0 0.0
    %839 = vmatprep.subr.mxu0 0.0
    %840 = vmatpush1.msra.mxu0 0.0
    %841 = vmatprep.subr.mxu0 0.0
    %842 = vmatpush1.msra.mxu0 0.0
    %843 = vmatprep.subr.mxu0 0.0
    %844 = vmatpush1.msra.mxu0 0.0
    %845 = vmatprep.subr.mxu0 0.0
    %846 = vmatpush1.msra.mxu0 0.0
    %847 = vmatprep.subr.mxu0 0.0
    %848 = vmatpush1.msra.mxu0 0.0
    %849 = vmatprep.subr.mxu0 0.0
    %850 = vmatpush1.msra.mxu0 0.0
    %851 = vmatprep.subr.mxu0 0.0
    %852 = vmatpush1.msra.mxu0 0.0
    %853 = vmatprep.subr.mxu0 0.0
    %854 = vmatpush1.msra.mxu0 0.0
    %855 = vmatprep.subr.mxu0 0.0
    %856 = vmatpush1.msra.mxu0 0.0
    %857 = vmatprep.subr.mxu0 0.0
    %858 = vmatpush1.msra.mxu0 0.0
    %859 = vmatprep.subr.mxu0 0.0
    %860 = vmatpush1.msra.mxu0 0.0
    %861 = vmatprep.subr.mxu0 0.0
    %862 = vmatpush1.msra.mxu0 0.0
    %863 = vmatprep.subr.mxu0 0.0
    %864 = vmatpush1.msra.mxu0 0.0
    %865 = vmatprep.subr.mxu0 0.0
    %866 = vmatpush1.msra.mxu0 0.0
    %867 = vmatprep.subr.mxu0 0.0
    %868 = vmatpush1.msra.mxu0 0.0
    %869 = vmatprep.subr.mxu0 0.0
    %870 = vmatpush1.msra.mxu0 0.0
    %871 = vmatprep.subr.mxu0 0.0
    %872 = vmatpush1.msra.mxu0 0.0
    %873 = vmatprep.subr.mxu0 0.0
    %874 = vmatpush1.msra.mxu0 0.0
    %875 = vmatprep.mubr.f32.mxu0 0.0
    %v876 = vand.u32 %v544, 4294901760
    %v877 = vsub.f32 %v544, %v876
    %v878 = vand.u32 %v877, 4294901760
    %879 = vmatmul.mubr.f32.gmra.mrb[0].mxu0 %v878
    %v880 = vpop.f32.mrb[0].mxu0
    %v881 = vadd.f32 %v799, %v880
    %v882 = vpop.f32.mrb[0].mxu0
    %883 = vmatprep.mubr.f32.mxu0 0.0
    %v884 = vand.u32 %v547, 4294901760
    %v885 = vsub.f32 %v547, %v884
    %v886 = vand.u32 %v885, 4294901760
    %887 = vmatmul.mubr.f32.gmra.mrb[0].mxu0 %v886
    %v888 = vpop.f32.mrb[0].mxu0
    %v889 = vadd.f32 %v806, %v888
    %v890 = vpop.f32.mrb[0].mxu0
    %891 = vdwg.mxu0
    %892 = vmatprep.subr.mxu0 0.0
    %v893 = vand.u32 %v37, 4294901760
    %v894 = vsub.f32 %v37, %v893
    %v895 = vand.u32 %v894, 4294901760
    %896 = vmatpush1.msra.mxu0 %v895
    %897 = vmatprep.subr.mxu0 0.0
    %v898 = vand.u32 %v550, 4294901760
    %v899 = vsub.f32 %v550, %v898
    %v900 = vand.u32 %v899, 4294901760
    %901 = vmatpush1.msra.mxu0 %v900
    %902 = vmatprep.subr.mxu0 0.0
    %903 = vmatpush1.msra.mxu0 0.0
    %904 = vmatprep.subr.mxu0 0.0
    %905 = vmatpush1.msra.mxu0 0.0
    %906 = vmatprep.subr.mxu0 0.0
    %907 = vmatpush1.msra.mxu0 0.0
    %908 = vmatprep.subr.mxu0 0.0
    %909 = vmatpush1.msra.mxu0 0.0
    %910 = vmatprep.subr.mxu0 0.0
    %911 = vmatpush1.msra.mxu0 0.0
    %912 = vmatprep.subr.mxu0 0.0
    %913 = vmatpush1.msra.mxu0 0.0
    %914 = vmatprep.subr.mxu0 0.0
    %915 = vmatpush1.msra.mxu0 0.0
    %916 = vmatprep.subr.mxu0 0.0
    %917 = vmatpush1.msra.mxu0 0.0
    %918 = vmatprep.subr.mxu0 0.0
    %919 = vmatpush1.msra.mxu0 0.0
    %920 = vmatprep.subr.mxu0 0.0
    %921 = vmatpush1.msra.mxu0 0.0
    %922 = vmatprep.subr.mxu0 0.0
    %923 = vmatpush1.msra.mxu0 0.0
    %924 = vmatprep.subr.mxu0 0.0
    %925 = vmatpush1.msra.mxu0 0.0
    %926 = vmatprep.subr.mxu0 0.0
    %927 = vmatpush1.msra.mxu0 0.0
    %928 = vmatprep.subr.mxu0 0.0
    %929 = vmatpush1.msra.mxu0 0.0
    %930 = vmatprep.subr.mxu0 0.0
    %931 = vmatpush1.msra.mxu0 0.0
    %932 = vmatprep.subr.mxu0 0.0
    %933 = vmatpush1.msra.mxu0 0.0
    %934 = vmatprep.subr.mxu0 0.0
    %935 = vmatpush1.msra.mxu0 0.0
    %936 = vmatprep.subr.mxu0 0.0
    %937 = vmatpush1.msra.mxu0 0.0
    %938 = vmatprep.subr.mxu0 0.0
    %939 = vmatpush1.msra.mxu0 0.0
    %940 = vmatprep.subr.mxu0 0.0
    %941 = vmatpush1.msra.mxu0 0.0
    %942 = vmatprep.subr.mxu0 0.0
    %943 = vmatpush1.msra.mxu0 0.0
    %944 = vmatprep.subr.mxu0 0.0
    %945 = vmatpush1.msra.mxu0 0.0
    %946 = vmatprep.subr.mxu0 0.0
    %947 = vmatpush1.msra.mxu0 0.0
    %948 = vmatprep.subr.mxu0 0.0
    %949 = vmatpush1.msra.mxu0 0.0
    %950 = vmatprep.subr.mxu0 0.0
    %951 = vmatpush1.msra.mxu0 0.0
    %952 = vmatprep.subr.mxu0 0.0
    %953 = vmatpush1.msra.mxu0 0.0
    %954 = vmatprep.subr.mxu0 0.0
    %955 = vmatpush1.msra.mxu0 0.0
    %956 = vmatprep.subr.mxu0 0.0
    %957 = vmatpush1.msra.mxu0 0.0
    %958 = vmatprep.subr.mxu0 0.0
    %959 = vmatpush1.msra.mxu0 0.0
    %960 = vmatprep.subr.mxu0 0.0
    %961 = vmatpush1.msra.mxu0 0.0
    %962 = vmatprep.mubr.f32.mxu0 0.0
    %v963 = vand.u32 %v544, 4294901760
    %964 = vmatmul.mubr.f32.gmra.mrb[0].mxu0 %v963
    %v965 = vpop.f32.mrb[0].mxu0
    %v966 = vadd.f32 %v881, %v965
    %v967 = vpop.f32.mrb[0].mxu0
    %968 = vmatprep.mubr.f32.mxu0 0.0
    %v969 = vand.u32 %v547, 4294901760
    %970 = vmatmul.mubr.f32.gmra.mrb[0].mxu0 %v969
    %v971 = vpop.f32.mrb[0].mxu0
    %v972 = vadd.f32 %v889, %v971
    %v973 = vpop.f32.mrb[0].mxu0
    %974 = vdwg.mxu0
    %975 = vmatprep.subr.mxu0 0.0
    %v976 = vand.u32 %v37, 4294901760
    %977 = vmatpush1.msra.mxu0 %v976
    %978 = vmatprep.subr.mxu0 0.0
    %v979 = vand.u32 %v550, 4294901760
    %980 = vmatpush1.msra.mxu0 %v979
    %981 = vmatprep.subr.mxu0 0.0
    %982 = vmatpush1.msra.mxu0 0.0
    %983 = vmatprep.subr.mxu0 0.0
    %984 = vmatpush1.msra.mxu0 0.0
    %985 = vmatprep.subr.mxu0 0.0
    %986 = vmatpush1.msra.mxu0 0.0
    %987 = vmatprep.subr.mxu0 0.0
    %988 = vmatpush1.msra.mxu0 0.0
    %989 = vmatprep.subr.mxu0 0.0
    %990 = vmatpush1.msra.mxu0 0.0
    %991 = vmatprep.subr.mxu0 0.0
    %992 = vmatpush1.msra.mxu0 0.0
    %993 = vmatprep.subr.mxu0 0.0
    %994 = vmatpush1.msra.mxu0 0.0
    %995 = vmatprep.subr.mxu0 0.0
    %996 = vmatpush1.msra.mxu0 0.0
    %997 = vmatprep.subr.mxu0 0.0
    %998 = vmatpush1.msra.mxu0 0.0
    %999 = vmatprep.subr.mxu0 0.0
    %1000 = vmatpush1.msra.mxu0 0.0
    %1001 = vmatprep.subr.mxu0 0.0
    %1002 = vmatpush1.msra.mxu0 0.0
    %1003 = vmatprep.subr.mxu0 0.0
    %1004 = vmatpush1.msra.mxu0 0.0
    %1005 = vmatprep.subr.mxu0 0.0
    %1006 = vmatpush1.msra.mxu0 0.0
    %1007 = vmatprep.subr.mxu0 0.0
    %1008 = vmatpush1.msra.mxu0 0.0
    %1009 = vmatprep.subr.mxu0 0.0
    %1010 = vmatpush1.msra.mxu0 0.0
    %1011 = vmatprep.subr.mxu0 0.0
    %1012 = vmatpush1.msra.mxu0 0.0
    %1013 = vmatprep.subr.mxu0 0.0
    %1014 = vmatpush1.msra.mxu0 0.0
    %1015 = vmatprep.subr.mxu0 0.0
    %1016 = vmatpush1.msra.mxu0 0.0
    %1017 = vmatprep.subr.mxu0 0.0
    %1018 = vmatpush1.msra.mxu0 0.0
    %1019 = vmatprep.subr.mxu0 0.0
    %1020 = vmatpush1.msra.mxu0 0.0
    %1021 = vmatprep.subr.mxu0 0.0
    %1022 = vmatpush1.msra.mxu0 0.0
    %1023 = vmatprep.subr.mxu0 0.0
    %1024 = vmatpush1.msra.mxu0 0.0
    %1025 = vmatprep.subr.mxu0 0.0
    %1026 = vmatpush1.msra.mxu0 0.0
    %1027 = vmatprep.subr.mxu0 0.0
    %1028 = vmatpush1.msra.mxu0 0.0
    %1029 = vmatprep.subr.mxu0 0.0
    %1030 = vmatpush1.msra.mxu0 0.0
    %1031 = vmatprep.subr.mxu0 0.0
    %1032 = vmatpush1.msra.mxu0 0.0
    %1033 = vmatprep.subr.mxu0 0.0
    %1034 = vmatpush1.msra.mxu0 0.0
    %1035 = vmatprep.subr.mxu0 0.0
    %1036 = vmatpush1.msra.mxu0 0.0
    %1037 = vmatprep.subr.mxu0 0.0
    %1038 = vmatpush1.msra.mxu0 0.0
    %1039 = vmatprep.subr.mxu0 0.0
    %1040 = vmatpush1.msra.mxu0 0.0
    %1041 = vmatprep.mubr.f32.mxu0 0.0
    %v1042 = vand.u32 %v544, 4294901760
    %1043 = vmatmul.mubr.f32.gmra.mrb[0].mxu0 %v1042
    %v1044 = vpop.f32.mrb[0].mxu0
    %v1045 = vadd.f32 %v966, %v1044
    %v1046 = vpop.f32.mrb[0].mxu0
    %1047 = vmatprep.mubr.f32.mxu0 0.0
    %v1048 = vand.u32 %v547, 4294901760
    %1049 = vmatmul.mubr.f32.gmra.mrb[0].mxu0 %v1048
    %v1050 = vpop.f32.mrb[0].mxu0
    %v1051 = vadd.f32 %v972, %v1050
    %v1052 = vpop.f32.mrb[0].mxu0
    %1053 = vdwg.mxu0
    %v1054 = vld [vmem:[%s4] sm:$0x1]
    %v1056 = vlaneseq
    %v1057 = vshrl.u32 %v1056, 7
    %v1058 = vsub.s32 0, %v1057
    %v1059 = vrot.slane %v1054, %v1058
    %v1061 = vadd.f32 %v1045, %v1059
    %v1062 = vadd.f32 %v1051, %v1059
    %vm1063 = vcmask 261120
    %1064 = vst.msk [vmem:[#allocation5] sm:$0xff] %vm1063, %v1061
    %1065 = vst.msk [vmem:[#allocation5 + $0x8] sm:$0xff] %vm1063, %v1062
    // Predicated region
    $region26: #{tpu_custom_call.1} parent=1 // pred_check
      _
    $region27: #{tpu_custom_call.1} parent=1 // pred_check_branch
      %1067 = sbr.rel (0) target = $region29
    $region28: #{tpu_custom_call.1} parent=1 // pred_region
      %s1069 = ssub.s32 256, 256
      %1070 = vsyncadd [#allocation4], %s1069
      %s1071 = sshll.u32 [#allocation5], 4
      %s1072 = int_to_ptr.vmem [resolvable:$true] %s1071
      %1077 = dma.vmem_to_hbm [thread:$0]  %s1072, 256, %s5, [#allocation4], 128, 128, 8
    $region29: #{tpu_custom_call.1} parent=1 // pred_fallthru
      _
    // Predicated region
    $region30: #{tpu_custom_call.1} parent=1 // pred_check
      _
    $region31: #{tpu_custom_call.1} parent=1 // pred_check_branch
      %1079 = sbr.rel (0) target = $region33
    $region32: #{tpu_custom_call.1} parent=1 // pred_region
      %1080 = dma.done [#allocation4], 256
    $region33: #{tpu_custom_call.1} parent=1 // pred_fallthru
      _
    %1081 = vsyncpa [#allocation3], 1
    %1082 = vsyncpa [#allocation4], 1

</llo_original>
